<compile_context>
chip_gen: v5e
topology: v5e:2x2
jax: 0.10.0
libtpu: 0.0.40
codegen_flags: <defaults>
</compile_context>

<pallas_src>
import math

import jax
import jax.numpy as jnp
from jax.experimental import pallas as pl
from jax.experimental.pallas import tpu as pltpu

BN_EPS = 1e-5
LANE = 128


def _gcn_prop_kernel(adj_ref, sup_ref, x_ref, wself_ref, shift_ref,
                     out_ref, acc_ref):
    """One (row-tile, k-tile) grid step of relu(adj @ support + x @ Wself' + shift)."""
    k = pl.program_id(1)

    @pl.when(k == 0)
    def _init():
        # Self-loop term + folded bias/BN shift, computed once per row tile.
        acc_ref[...] = jnp.dot(x_ref[...], wself_ref[...],
                               preferred_element_type=jnp.float32) + shift_ref[...]

    # Dominant N^2 term: neighborhood aggregation over this K tile
    # (bf16 MXU operands, f32 accumulation in VMEM scratch).
    acc_ref[...] += jnp.dot(adj_ref[...], sup_ref[...],
                            preferred_element_type=jnp.float32)

    @pl.when(k == pl.num_programs(1) - 1)
    def _finalize():
        out_ref[...] = jnp.maximum(acc_ref[...], 0.0).astype(out_ref.dtype)


def _pick_tile(n, preferred=(512, 256, 128)):
    for t in preferred:
        if n % t == 0:
            return t
    return n  # no tiling: whole dim as a single block (fine for small graphs)


def _pad_cols(a, width):
    pad = width - a.shape[-1]
    return a if pad == 0 else jnp.pad(a, ((0, 0), (0, pad)))


def gcn_layer(h, adj_bf, w_fold, wself_fold, shift, *, fp, tile_m, tile_k,
              out_dtype):
    """One fused GCN layer.  h: (N, fin) activations; adj_bf: (N, N) bf16."""
    n, fin = h.shape

    h_bf = h.astype(jnp.bfloat16)
    w_bf = _pad_cols(w_fold, fp).astype(jnp.bfloat16)
    wself_bf = _pad_cols(wself_fold, fp).astype(jnp.bfloat16)
    shift_p = _pad_cols(shift.reshape(1, -1), fp).astype(jnp.float32)

    # Hoisted projection: computed once per layer (NOT once per row tile).
    support = jnp.dot(h_bf, w_bf,
                      preferred_element_type=jnp.float32).astype(jnp.bfloat16)

    grid = (n // tile_m, n // tile_k)
    return pl.pallas_call(
        _gcn_prop_kernel,
        out_shape=jax.ShapeDtypeStruct((n, fp), out_dtype),
        grid_spec=pltpu.PrefetchScalarGridSpec(
            num_scalar_prefetch=0,
            grid=grid,
            in_specs=[
                pl.BlockSpec((tile_m, tile_k), lambda i, k: (i, k)),  # adj tile
                pl.BlockSpec((tile_k, fp), lambda i, k: (k, 0)),      # support K tile
                pl.BlockSpec((tile_m, fin), lambda i, k: (i, 0)),     # h row tile
                pl.BlockSpec((fin, fp), lambda i, k: (0, 0)),         # W_self' (folded)
                pl.BlockSpec((1, fp), lambda i, k: (0, 0)),           # shift (folded bias/BN)
            ],
            out_specs=pl.BlockSpec((tile_m, fp), lambda i, k: (i, 0)),
            scratch_shapes=[pltpu.VMEM((tile_m, fp), jnp.float32)],
        ),
        compiler_params=pltpu.CompilerParams(
            dimension_semantics=("parallel", "arbitrary"),
            vmem_limit_bytes=48 * 1024 * 1024,
        ),
    )(adj_bf, support, h_bf, wself_bf, shift_p)


def _fold_bn(p):
    scale = p["gamma"] * jax.lax.rsqrt(p["var"] + BN_EPS)
    w_fold = p["w"] * scale[None, :]
    wself_fold = p["wself"] * scale[None, :]
    shift = (p["bias"] - p["mean"]) * scale + p["beta"]
    return w_fold, wself_fold, shift


@jax.jit
def multilayer_gcn_block(x, adj, params):
    """Forward of MultiLayerGCNBlock (aggrmethod='nores', dense=False): the
    output is the stack of GCN layers applied to x (no concat/residual);
    dropout/BN treated in eval mode."""
    n = x.shape[0]
    fout = params[0]["w"].shape[1]
    fp = ((fout + LANE - 1) // LANE) * LANE   # lane-dense feature width (multiple of 128)
    tile_m = _pick_tile(n)
    tile_k = _pick_tile(n)

    adj_bf = adj.astype(jnp.bfloat16)         # cast once, reused by every layer
    h = x
    for li, p in enumerate(params):
        w_fold, wself_fold, shift = _fold_bn(p)
        if h.shape[1] != w_fold.shape[0]:
            # Activations stay zero-padded to fp between layers; zero-pad the
            # weight input rows to match (padded activation columns are 0).
            pad = h.shape[1] - w_fold.shape[0]
            w_fold = jnp.pad(w_fold, ((0, pad), (0, 0)))
            wself_fold = jnp.pad(wself_fold, ((0, pad), (0, 0)))
        last = li == len(params) - 1
        h = gcn_layer(h, adj_bf, w_fold, wself_fold, shift, fp=fp,
                      tile_m=tile_m, tile_k=tile_k,
                      out_dtype=jnp.float32 if last else jnp.bfloat16)
    return h[:, :fout]


def glorot_init(key, fin, fout):
    stdv = math.sqrt(6.0 / (fin + fout))
    return jax.random.uniform(key, (fin, fout), jnp.float32, -stdv, stdv)


def make_multilayer_gcn_params(key, in_features, out_features, nbaselayer):
    """Deterministic parameter init mirroring GraphConvolutionBS shapes.

    Note: the PyTorch reset_parameters() never actually initializes
    self_weight (it glorot-inits `weight` twice), i.e. self_weight is
    uninitialized memory.  We glorot-init it deterministically here.
    """
    params = []
    fin = in_features
    for _ in range(nbaselayer):
        key, k1, k2 = jax.random.split(key, 3)
        params.append(dict(
            w=glorot_init(k1, fin, out_features),
            wself=glorot_init(k2, fin, out_features),
            bias=jnp.zeros((out_features,), jnp.float32),
            gamma=jnp.ones((out_features,), jnp.float32),
            beta=jnp.zeros((out_features,), jnp.float32),
            mean=jnp.zeros((out_features,), jnp.float32),
            var=jnp.ones((out_features,), jnp.float32),
        ))
        fin = out_features
    return params


def _reference_forward_f32(x, adj, params):
    """Pure-JAX f32 reference with the module's eval-mode semantics."""
    h = x
    for p in params:
        out = adj @ (h @ p["w"]) + h @ p["wself"] + p["bias"]
        out = (out - p["mean"]) * jax.lax.rsqrt(p["var"] + BN_EPS) * p["gamma"] + p["beta"]
        h = jnp.maximum(out, 0.0)
    return h


def _reference_forward_bf16(x, adj, params):
    """Pure-JAX reference mirroring the kernel's numerics exactly
    (bf16 matmul operands, f32 accumulation, BN folded into weights)."""
    adj_bf = adj.astype(jnp.bfloat16)
    h = x
    for li, p in enumerate(params):
        w_fold, wself_fold, shift = _fold_bn(p)
        h_bf = h.astype(jnp.bfloat16)
        sup = jnp.dot(h_bf, w_fold.astype(jnp.bfloat16),
                      preferred_element_type=jnp.float32).astype(jnp.bfloat16)
        out = jnp.dot(adj_bf, sup, preferred_element_type=jnp.float32)
        out = out + jnp.dot(h_bf, wself_fold.astype(jnp.bfloat16),
                            preferred_element_type=jnp.float32) + shift
        h = jnp.maximum(out, 0.0)
        if li != len(params) - 1:
            h = h.astype(jnp.bfloat16).astype(jnp.float32)
    return h


if __name__ == "__main__":
    # Small shapes consistent with the module: N graph nodes, feature dims.
    N = 64
    IN_FEATURES = 16
    OUT_FEATURES = 32
    NBASELAYER = 2

    root = jax.random.PRNGKey(0)
    kx, kadj, kparams = jax.random.split(root, 3)

    x = jax.random.normal(kx, (N, IN_FEATURES), jnp.float32)
    # Dense "adjacency" (torch.spmm on a dense tensor is just a matmul);
    # row-normalized nonnegative matrix for a sane GCN propagation.
    adj_raw = jax.random.uniform(kadj, (N, N), jnp.float32)
    adj = adj_raw / jnp.sum(adj_raw, axis=1, keepdims=True)

    params = make_multilayer_gcn_params(kparams, IN_FEATURES, OUT_FEATURES,
                                        NBASELAYER)

    out = multilayer_gcn_block(x, adj, params)
    out = jax.block_until_ready(out)
    assert out.shape == (N, OUT_FEATURES)

    # Exact-numerics check (same bf16 operand rounding as the kernel).
    ref_bf16 = _reference_forward_bf16(x, adj, params)
    assert jnp.allclose(out, ref_bf16, atol=1e-3, rtol=1e-3), \
        "mismatch vs bf16-matched reference"

    # Module-semantics check in f32 (loosened tolerance for bf16 operands).
    ref_f32 = _reference_forward_f32(x, adj, params)
    assert jnp.allclose(out, ref_f32, atol=6e-2, rtol=6e-2), \
        "mismatch vs f32 module reference"

    print("KERNEL_OK")
</pallas_src>

<mosaic_0001>
module attributes {stable_mosaic.version = 11 : i64} {
  func.func @_gcn_prop_kernel(%arg0: i32, %arg1: i32, %arg2: memref<64x64xbf16, #tpu.memory_space<vmem>>, %arg3: memref<64x128xbf16, #tpu.memory_space<vmem>>, %arg4: memref<64x16xbf16, #tpu.memory_space<vmem>>, %arg5: memref<16x128xbf16, #tpu.memory_space<vmem>>, %arg6: memref<1x128xf32, #tpu.memory_space<vmem>>, %arg7: memref<64x128xbf16, #tpu.memory_space<vmem>>, %arg8: memref<64x128xf32, #tpu.memory_space<vmem>>) attributes {dimension_semantics = [#tpu.dimension_semantics<parallel>, #tpu.dimension_semantics<arbitrary>], iteration_bounds = array<i64: 1, 1>, scalar_prefetch = 0 : i64, scratch_operands = 1 : i64, tpu.core_type = #tpu.core_type<tc>, window_params = [{transform_indices = @transform_0, window_bounds = array<i64: 64, 64>}, {transform_indices = @transform_1, window_bounds = array<i64: 64, 128>}, {transform_indices = @transform_2, window_bounds = array<i64: 64, 16>}, {pipeline_mode = #tpu.pipeline_mode<synchronous>, transform_indices = @transform_3, window_bounds = array<i64: 16, 128>}, {pipeline_mode = #tpu.pipeline_mode<synchronous>, transform_indices = @transform_4, window_bounds = array<i64: 1, 128>}, {transform_indices = @transform_5, window_bounds = array<i64: 64, 128>}]} {
    %c0_i32 = arith.constant 0 : i32
    %0 = arith.cmpi eq, %arg1, %c0_i32 : i32
    %1 = arith.extui %0 : i1 to i32
    %c0_i32_0 = arith.constant 0 : i32
    %2 = arith.cmpi ne, %1, %c0_i32_0 : i32
    scf.if %2 {
      %c0_10 = arith.constant 0 : index
      %c0_11 = arith.constant 0 : index
      %12 = vector.load %arg4[%c0_10, %c0_11] : memref<64x16xbf16, #tpu.memory_space<vmem>>, vector<64x16xbf16>
      %c0_12 = arith.constant 0 : index
      %c0_13 = arith.constant 0 : index
      %13 = vector.load %arg5[%c0_12, %c0_13] : memref<16x128xbf16, #tpu.memory_space<vmem>>, vector<16x128xbf16>
      %cst_14 = arith.constant dense<0.000000e+00> : vector<64x128xf32>
      %14 = tpu.matmul %12, %13, %cst_14 {dimension_numbers = #tpu.dot_dimension_numbers<[1], [0], [0], [1], [0, 0, 1, 1], [], []>} : vector<64x16xbf16>, vector<16x128xbf16>, vector<64x128xf32> -> vector<64x128xf32>
      %c0_15 = arith.constant 0 : index
      %c0_16 = arith.constant 0 : index
      %15 = vector.load %arg6[%c0_15, %c0_16] : memref<1x128xf32, #tpu.memory_space<vmem>>, vector<1x128xf32>
      %16 = vector.broadcast %15 : vector<1x128xf32> to vector<64x128xf32>
      %17 = arith.addf %14, %16 : vector<64x128xf32>
      %c0_17 = arith.constant 0 : index
      %c0_18 = arith.constant 0 : index
      %18 = vector.load %arg8[%c0_17, %c0_18] : memref<64x128xf32, #tpu.memory_space<vmem>>, vector<64x128xf32>
      tpu.vector_store %arg8[%c0_17, %c0_18], %17 {strides = array<i32>} : memref<64x128xf32, #tpu.memory_space<vmem>>, vector<64x128xf32>,
    } else {
    }
    %c0 = arith.constant 0 : index
    %c0_1 = arith.constant 0 : index
    %3 = vector.load %arg8[%c0, %c0_1] : memref<64x128xf32, #tpu.memory_space<vmem>>, vector<64x128xf32>
    %c0_2 = arith.constant 0 : index
    %c0_3 = arith.constant 0 : index
    %4 = vector.load %arg2[%c0_2, %c0_3] : memref<64x64xbf16, #tpu.memory_space<vmem>>, vector<64x64xbf16>
    %c0_4 = arith.constant 0 : index
    %c0_5 = arith.constant 0 : index
    %5 = vector.load %arg3[%c0_4, %c0_5] : memref<64x128xbf16, #tpu.memory_space<vmem>>, vector<64x128xbf16>
    %cst = arith.constant dense<0.000000e+00> : vector<64x128xf32>
    %6 = tpu.matmul %4, %5, %cst {dimension_numbers = #tpu.dot_dimension_numbers<[1], [0], [0], [1], [0, 0, 1, 1], [], []>} : vector<64x64xbf16>, vector<64x128xbf16>, vector<64x128xf32> -> vector<64x128xf32>
    %7 = arith.addf %3, %6 : vector<64x128xf32>
    %c0_6 = arith.constant 0 : index
    %c0_7 = arith.constant 0 : index
    %8 = vector.load %arg8[%c0_6, %c0_7] : memref<64x128xf32, #tpu.memory_space<vmem>>, vector<64x128xf32>
    tpu.vector_store %arg8[%c0_6, %c0_7], %7 {strides = array<i32>} : memref<64x128xf32, #tpu.memory_space<vmem>>, vector<64x128xf32>,
    %c0_i32_8 = arith.constant 0 : i32
    %9 = arith.cmpi eq, %arg1, %c0_i32_8 : i32
    %10 = arith.extui %9 : i1 to i32
    %c0_i32_9 = arith.constant 0 : i32
    %11 = arith.cmpi ne, %10, %c0_i32_9 : i32
    scf.if %11 {
      %c0_10 = arith.constant 0 : index
      %c0_11 = arith.constant 0 : index
      %12 = vector.load %arg8[%c0_10, %c0_11] : memref<64x128xf32, #tpu.memory_space<vmem>>, vector<64x128xf32>
      %cst_12 = arith.constant 0.000000e+00 : f32
      %13 = vector.broadcast %cst_12 : f32 to vector<64x128xf32>
      %14 = arith.maximumf %12, %13 : vector<64x128xf32>
      %15 = arith.truncf %14 : vector<64x128xf32> to vector<64x128xbf16>
      %c0_13 = arith.constant 0 : index
      %c0_14 = arith.constant 0 : index
      %16 = vector.load %arg7[%c0_13, %c0_14] : memref<64x128xbf16, #tpu.memory_space<vmem>>, vector<64x128xbf16>
      tpu.vector_store %arg7[%c0_13, %c0_14], %15 {strides = array<i32>} : memref<64x128xbf16, #tpu.memory_space<vmem>>, vector<64x128xbf16>,
    } else {
    }
    return
  }
  func.func @transform_0(%arg0: i32, %arg1: i32) -> (i32, i32) {
    %c0_i32 = arith.constant 0 : i32
    return %arg0, %arg1 : i32, i32
  }
  func.func @transform_1(%arg0: i32, %arg1: i32) -> (i32, i32) {
    %c0_i32 = arith.constant 0 : i32
    %c0_i32_0 = arith.constant 0 : i32
    return %arg1, %c0_i32 : i32, i32
  }
  func.func @transform_2(%arg0: i32, %arg1: i32) -> (i32, i32) {
    %c0_i32 = arith.constant 0 : i32
    %c0_i32_0 = arith.constant 0 : i32
    return %arg0, %c0_i32 : i32, i32
  }
  func.func @transform_3(%arg0: i32, %arg1: i32) -> (i32, i32) {
    %c0_i32 = arith.constant 0 : i32
    %c0_i32_0 = arith.constant 0 : i32
    %c0_i32_1 = arith.constant 0 : i32
    return %c0_i32, %c0_i32_0 : i32, i32
  }
  func.func @transform_4(%arg0: i32, %arg1: i32) -> (i32, i32) {
    %c0_i32 = arith.constant 0 : i32
    %c0_i32_0 = arith.constant 0 : i32
    %c0_i32_1 = arith.constant 0 : i32
    return %c0_i32, %c0_i32_0 : i32, i32
  }
  func.func @transform_5(%arg0: i32, %arg1: i32) -> (i32, i32) {
    %c0_i32 = arith.constant 0 : i32
    %c0_i32_0 = arith.constant 0 : i32
    return %arg0, %c0_i32 : i32, i32
  }
}

module attributes {stable_mosaic.version = 11 : i64} {
  func.func @_gcn_prop_kernel(%arg0: i32, %arg1: i32, %arg2: memref<64x64xbf16, #tpu.memory_space<vmem>>, %arg3: memref<64x128xbf16, #tpu.memory_space<vmem>>, %arg4: memref<64x128xbf16, #tpu.memory_space<vmem>>, %arg5: memref<128x128xbf16, #tpu.memory_space<vmem>>, %arg6: memref<1x128xf32, #tpu.memory_space<vmem>>, %arg7: memref<64x128xf32, #tpu.memory_space<vmem>>, %arg8: memref<64x128xf32, #tpu.memory_space<vmem>>) attributes {dimension_semantics = [#tpu.dimension_semantics<parallel>, #tpu.dimension_semantics<arbitrary>], iteration_bounds = array<i64: 1, 1>, scalar_prefetch = 0 : i64, scratch_operands = 1 : i64, tpu.core_type = #tpu.core_type<tc>, window_params = [{transform_indices = @transform_0, window_bounds = array<i64: 64, 64>}, {transform_indices = @transform_1, window_bounds = array<i64: 64, 128>}, {transform_indices = @transform_2, window_bounds = array<i64: 64, 128>}, {pipeline_mode = #tpu.pipeline_mode<synchronous>, transform_indices = @transform_3, window_bounds = array<i64: 128, 128>}, {pipeline_mode = #tpu.pipeline_mode<synchronous>, transform_indices = @transform_4, window_bounds = array<i64: 1, 128>}, {transform_indices = @transform_5, window_bounds = array<i64: 64, 128>}]} {
    %c0_i32 = arith.constant 0 : i32
    %0 = arith.cmpi eq, %arg1, %c0_i32 : i32
    %1 = arith.extui %0 : i1 to i32
    %c0_i32_0 = arith.constant 0 : i32
    %2 = arith.cmpi ne, %1, %c0_i32_0 : i32
    scf.if %2 {
      %c0_10 = arith.constant 0 : index
      %c0_11 = arith.constant 0 : index
      %12 = vector.load %arg4[%c0_10, %c0_11] : memref<64x128xbf16, #tpu.memory_space<vmem>>, vector<64x128xbf16>
      %c0_12 = arith.constant 0 : index
      %c0_13 = arith.constant 0 : index
      %13 = vector.load %arg5[%c0_12, %c0_13] : memref<128x128xbf16, #tpu.memory_space<vmem>>, vector<128x128xbf16>
      %cst_14 = arith.constant dense<0.000000e+00> : vector<64x128xf32>
      %14 = tpu.matmul %12, %13, %cst_14 {dimension_numbers = #tpu.dot_dimension_numbers<[1], [0], [0], [1], [0, 0, 1, 1], [], []>} : vector<64x128xbf16>, vector<128x128xbf16>, vector<64x128xf32> -> vector<64x128xf32>
      %c0_15 = arith.constant 0 : index
      %c0_16 = arith.constant 0 : index
      %15 = vector.load %arg6[%c0_15, %c0_16] : memref<1x128xf32, #tpu.memory_space<vmem>>, vector<1x128xf32>
      %16 = vector.broadcast %15 : vector<1x128xf32> to vector<64x128xf32>
      %17 = arith.addf %14, %16 : vector<64x128xf32>
      %c0_17 = arith.constant 0 : index
      %c0_18 = arith.constant 0 : index
      %18 = vector.load %arg8[%c0_17, %c0_18] : memref<64x128xf32, #tpu.memory_space<vmem>>, vector<64x128xf32>
      tpu.vector_store %arg8[%c0_17, %c0_18], %17 {strides = array<i32>} : memref<64x128xf32, #tpu.memory_space<vmem>>, vector<64x128xf32>,
    } else {
    }
    %c0 = arith.constant 0 : index
    %c0_1 = arith.constant 0 : index
    %3 = vector.load %arg8[%c0, %c0_1] : memref<64x128xf32, #tpu.memory_space<vmem>>, vector<64x128xf32>
    %c0_2 = arith.constant 0 : index
    %c0_3 = arith.constant 0 : index
    %4 = vector.load %arg2[%c0_2, %c0_3] : memref<64x64xbf16, #tpu.memory_space<vmem>>, vector<64x64xbf16>
    %c0_4 = arith.constant 0 : index
    %c0_5 = arith.constant 0 : index
    %5 = vector.load %arg3[%c0_4, %c0_5] : memref<64x128xbf16, #tpu.memory_space<vmem>>, vector<64x128xbf16>
    %cst = arith.constant dense<0.000000e+00> : vector<64x128xf32>
    %6 = tpu.matmul %4, %5, %cst {dimension_numbers = #tpu.dot_dimension_numbers<[1], [0], [0], [1], [0, 0, 1, 1], [], []>} : vector<64x64xbf16>, vector<64x128xbf16>, vector<64x128xf32> -> vector<64x128xf32>
    %7 = arith.addf %3, %6 : vector<64x128xf32>
    %c0_6 = arith.constant 0 : index
    %c0_7 = arith.constant 0 : index
    %8 = vector.load %arg8[%c0_6, %c0_7] : memref<64x128xf32, #tpu.memory_space<vmem>>, vector<64x128xf32>
    tpu.vector_store %arg8[%c0_6, %c0_7], %7 {strides = array<i32>} : memref<64x128xf32, #tpu.memory_space<vmem>>, vector<64x128xf32>,
    %c0_i32_8 = arith.constant 0 : i32
    %9 = arith.cmpi eq, %arg1, %c0_i32_8 : i32
    %10 = arith.extui %9 : i1 to i32
    %c0_i32_9 = arith.constant 0 : i32
    %11 = arith.cmpi ne, %10, %c0_i32_9 : i32
    scf.if %11 {
      %c0_10 = arith.constant 0 : index
      %c0_11 = arith.constant 0 : index
      %12 = vector.load %arg8[%c0_10, %c0_11] : memref<64x128xf32, #tpu.memory_space<vmem>>, vector<64x128xf32>
      %cst_12 = arith.constant 0.000000e+00 : f32
      %13 = vector.broadcast %cst_12 : f32 to vector<64x128xf32>
      %14 = arith.maximumf %12, %13 : vector<64x128xf32>
      %c0_13 = arith.constant 0 : index
      %c0_14 = arith.constant 0 : index
      %15 = vector.load %arg7[%c0_13, %c0_14] : memref<64x128xf32, #tpu.memory_space<vmem>>, vector<64x128xf32>
      tpu.vector_store %arg7[%c0_13, %c0_14], %14 {strides = array<i32>} : memref<64x128xf32, #tpu.memory_space<vmem>>, vector<64x128xf32>,
    } else {
    }
    return
  }
  func.func @transform_0(%arg0: i32, %arg1: i32) -> (i32, i32) {
    %c0_i32 = arith.constant 0 : i32
    return %arg0, %arg1 : i32, i32
  }
  func.func @transform_1(%arg0: i32, %arg1: i32) -> (i32, i32) {
    %c0_i32 = arith.constant 0 : i32
    %c0_i32_0 = arith.constant 0 : i32
    return %arg1, %c0_i32 : i32, i32
  }
  func.func @transform_2(%arg0: i32, %arg1: i32) -> (i32, i32) {
    %c0_i32 = arith.constant 0 : i32
    %c0_i32_0 = arith.constant 0 : i32
    return %arg0, %c0_i32 : i32, i32
  }
  func.func @transform_3(%arg0: i32, %arg1: i32) -> (i32, i32) {
    %c0_i32 = arith.constant 0 : i32
    %c0_i32_0 = arith.constant 0 : i32
    %c0_i32_1 = arith.constant 0 : i32
    return %c0_i32, %c0_i32_0 : i32, i32
  }
  func.func @transform_4(%arg0: i32, %arg1: i32) -> (i32, i32) {
    %c0_i32 = arith.constant 0 : i32
    %c0_i32_0 = arith.constant 0 : i32
    %c0_i32_1 = arith.constant 0 : i32
    return %c0_i32, %c0_i32_0 : i32, i32
  }
  func.func @transform_5(%arg0: i32, %arg1: i32) -> (i32, i32) {
    %c0_i32 = arith.constant 0 : i32
    %c0_i32_0 = arith.constant 0 : i32
    return %arg0, %c0_i32 : i32, i32
  }
}

</mosaic_0001>

<llo_original>
// kernel: multilayer_gcn_block.2
$region0: #{multilayer_gcn_block.2}
  #allocation0 [shape = 'u32[]', space=smem, size = 0x4, offset = 0x4, fixed_abs, tag = 'smem constant byte address 0x4 - core index']
  #allocation1 [shape = 'u32[72,128]{1,0:T(1,128)}', space=vmem, size = 0x9000, scoped, tag = 'internal scratch']
  #allocation2 [shape = 'f32[64,128]{1,0:T(8,128)}', space=vmem, size = 0x8000, scoped, tag = 'scratch operand']
  %s0 = inlined_call_operand.vmem [shape: bf16[64,64], index: 0, kind: input, shape index: {}]
  %s1 = inlined_call_operand.vmem [shape: bf16[64,128], index: 1, kind: input, shape index: {}]
  %s2 = inlined_call_operand.vmem [shape: bf16[64,16], index: 2, kind: input, shape index: {}]
  %s3 = inlined_call_operand.vmem [shape: bf16[16,128], index: 3, kind: input, shape index: {}]
  %s4 = inlined_call_operand.vmem [shape: f32[1,128], index: 4, kind: input, shape index: {}]
  %s5 = inlined_call_operand.vmem [shape: bf16[64,128], index: 5, kind: output, shape index: {}]
  %s6 = sld [smem:[#allocation0]]
  $region38: #{multilayer_gcn_block.2} parent=0
    _
  %s8 = ssub.s32 1, %s6
  %s9 = scalar_select 0, %s8, %s6
  // Predicated region
  $region2: #{multilayer_gcn_block.2} parent=0 // pred_check
    _
  $region3: #{multilayer_gcn_block.2} parent=0 // pred_check_branch
    %11 = sbr.rel (0) target = $region5
  $region4: #{multilayer_gcn_block.2} parent=0 // pred_region
    _
  $region5: #{multilayer_gcn_block.2} parent=0 // pred_fallthru
    _
  // Predicated region
  $region6: #{multilayer_gcn_block.2} parent=0 // pred_check
    _
  $region7: #{multilayer_gcn_block.2} parent=0 // pred_check_branch
    %13 = sbr.rel (0) target = $region9
  $region8: #{multilayer_gcn_block.2} parent=0 // pred_region
    _
  $region9: #{multilayer_gcn_block.2} parent=0 // pred_fallthru
    _
  // Predicated region
  $region10: #{multilayer_gcn_block.2} parent=0 // pred_check
    _
  $region11: #{multilayer_gcn_block.2} parent=0 // pred_check_branch
    %15 = sbr.rel (0) target = $region13
  $region12: #{multilayer_gcn_block.2} parent=0 // pred_region
    _
  $region13: #{multilayer_gcn_block.2} parent=0 // pred_fallthru
    _
  // Predicated region
  $region14: #{multilayer_gcn_block.2} parent=0 // pred_check
    _
  $region15: #{multilayer_gcn_block.2} parent=0 // pred_check_branch
    %17 = sbr.rel (0) target = $region17
  $region16: #{multilayer_gcn_block.2} parent=0 // pred_region
    _
  $region17: #{multilayer_gcn_block.2} parent=0 // pred_fallthru
    _
  // Predicated region
  $region18: #{multilayer_gcn_block.2} parent=0 // pred_check
    _
  $region19: #{multilayer_gcn_block.2} parent=0 // pred_check_branch
    %19 = sbr.rel (0) target = $region21
  $region20: #{multilayer_gcn_block.2} parent=0 // pred_region
    _
  $region21: #{multilayer_gcn_block.2} parent=0 // pred_fallthru
    _
  %p21 = scmp.eq.s32.totalorder 0, 0
  // Predicated region
  $region22: #{multilayer_gcn_block.2} parent=0 // pred_check
    %p22 = pneg %p21
  $region23: #{multilayer_gcn_block.2} parent=0 // pred_check_branch
    %24 = sbr.rel (%p22) target = $region25
  $region24: #{multilayer_gcn_block.2} parent=0 // pred_region
    %v25 = vld [vmem:[%s2] sm:$0xf]
    %v26 = vld [vmem:[%s2 + $0x4] sm:$0xf]
    %v27 = vld [vmem:[%s2 + $0x8] sm:$0xf]
    %v28 = vld [vmem:[%s2 + $0xc] sm:$0xf]
    %v29 = vld [vmem:[%s2 + $0x10] sm:$0xf]
    %v30 = vld [vmem:[%s2 + $0x14] sm:$0xf]
    %v31 = vld [vmem:[%s2 + $0x18] sm:$0xf]
    %v32 = vld [vmem:[%s2 + $0x1c] sm:$0xf]
    %v33 = vld [vmem:[%s3] sm:$0xf]
    %v34 = vld [vmem:[%s3 + $0x4] sm:$0xf]
    %v35 = vld [vmem:[%s4] sm:$0x1]
    %v37 = vperm.slane %v35, 0
    %v47 = vunpack.c.l.b16 %v25
    %v48 = vunpack.c.l.b16 %v26
    %v49 = vunpack.c.l.b16 %v27
    %v50 = vunpack.c.l.b16 %v28
    %v51 = vunpack.c.l.b16 %v29
    %v52 = vunpack.c.l.b16 %v30
    %v53 = vunpack.c.l.b16 %v31
    %v54 = vunpack.c.l.b16 %v32
    %v55 = vpack.c.b16 %v48, %v47
    %v56 = vpack.c.b16 %v50, %v49
    %v57 = vpack.c.b16 %v52, %v51
    %v58 = vpack.c.b16 %v54, %v53
    %v61 = vunpack.c.l.b16 %v33
    %v62 = vunpack.c.l.b16 %v34
    %v63 = vpack.c.b16 %v62, %v61
    %vm65 = vcmask 130048
    %v67 = vsel %vm65, %v55, 0
    %v70 = vsel %vm65, %v56, 0
    %v73 = vsel %vm65, %v57, 0
    %v76 = vsel %vm65, %v58, 0
    %78 = vmatpush.bf16.msra.mxu0 0
    %79 = vmatpush.bf16.msra.mxu0 0
    %80 = vmatpush.bf16.msra.mxu0 0
    %81 = vmatpush.bf16.msra.mxu0 0
    %82 = vmatpush.bf16.msra.mxu0 0
    %83 = vmatpush.bf16.msra.mxu0 0
    %84 = vmatpush.bf16.msra.mxu0 0
    %85 = vmatpush.bf16.msra.mxu0 %v63
    %86 = vmatmul.bf16.gmra.mxu0 %v67
    %v87 = vpop.f32.mrf.mxu0
    %v88 = vadd.f32 %v37, %v87
    %v89 = vpop.f32.mrf.mxu0
    %v90 = vadd.f32 %v37, %v89
    %91 = vmatmul.bf16.gmra.mxu0 %v70
    %v92 = vpop.f32.mrf.mxu0
    %v93 = vadd.f32 %v37, %v92
    %v94 = vpop.f32.mrf.mxu0
    %v95 = vadd.f32 %v37, %v94
    %96 = vmatmul.bf16.gmra.mxu0 %v73
    %v97 = vpop.f32.mrf.mxu0
    %v98 = vadd.f32 %v37, %v97
    %v99 = vpop.f32.mrf.mxu0
    %v100 = vadd.f32 %v37, %v99
    %101 = vmatmul.bf16.gmra.mxu0 %v76
    %v102 = vpop.f32.mrf.mxu0
    %v103 = vadd.f32 %v37, %v102
    %v104 = vpop.f32.mrf.mxu0
    %v105 = vadd.f32 %v37, %v104
    %106 = vdwg.mxu0
    %107 = vst [vmem:[#allocation2] sm:$0xff] %v88
    %108 = vst [vmem:[#allocation2 + $0x8] sm:$0xff] %v90
    %109 = vst [vmem:[#allocation2 + $0x10] sm:$0xff] %v93
    %110 = vst [vmem:[#allocation2 + $0x18] sm:$0xff] %v95
    %111 = vst [vmem:[#allocation2 + $0x20] sm:$0xff] %v98
    %112 = vst [vmem:[#allocation2 + $0x28] sm:$0xff] %v100
    %113 = vst [vmem:[#allocation2 + $0x30] sm:$0xff] %v103
    %114 = vst [vmem:[#allocation2 + $0x38] sm:$0xff] %v105
  $region25: #{multilayer_gcn_block.2} parent=0 // pred_fallthru
    _
  %v115 = vld [vmem:[#allocation2] sm:$0xff]
  %v116 = vld [vmem:[#allocation2 + $0x8] sm:$0xff]
  %v117 = vld [vmem:[#allocation2 + $0x10] sm:$0xff]
  %v118 = vld [vmem:[#allocation2 + $0x18] sm:$0xff]
  %v119 = vld [vmem:[#allocation2 + $0x20] sm:$0xff]
  %v120 = vld [vmem:[#allocation2 + $0x28] sm:$0xff]
  %v121 = vld [vmem:[#allocation2 + $0x30] sm:$0xff]
  %v122 = vld [vmem:[#allocation2 + $0x38] sm:$0xff]
  %v123 = vld [vmem:[%s0] sm:$0xf]
  %v124 = vld [vmem:[%s0 + $0x4] sm:$0xf]
  %v125 = vld [vmem:[%s0 + $0x8] sm:$0xf]
  %v126 = vld [vmem:[%s0 + $0xc] sm:$0xf]
  %v127 = vld [vmem:[%s0 + $0x10] sm:$0xf]
  %v128 = vld [vmem:[%s0 + $0x14] sm:$0xf]
  %v129 = vld [vmem:[%s0 + $0x18] sm:$0xf]
  %v130 = vld [vmem:[%s0 + $0x1c] sm:$0xf]
  %v131 = vld [vmem:[%s1] sm:$0xf]
  %v132 = vld [vmem:[%s1 + $0x4] sm:$0xf]
  %v133 = vld [vmem:[%s1 + $0x8] sm:$0xf]
  %v134 = vld [vmem:[%s1 + $0xc] sm:$0xf]
  %v135 = vld [vmem:[%s1 + $0x10] sm:$0xf]
  %v136 = vld [vmem:[%s1 + $0x14] sm:$0xf]
  %v137 = vld [vmem:[%s1 + $0x18] sm:$0xf]
  %v138 = vld [vmem:[%s1 + $0x1c] sm:$0xf]
  %v147 = vunpack.c.l.b16 %v123
  %v148 = vunpack.c.l.b16 %v124
  %v149 = vunpack.c.l.b16 %v125
  %v150 = vunpack.c.l.b16 %v126
  %v151 = vunpack.c.l.b16 %v127
  %v152 = vunpack.c.l.b16 %v128
  %v153 = vunpack.c.l.b16 %v129
  %v154 = vunpack.c.l.b16 %v130
  %v155 = vpack.c.b16 %v148, %v147
  %v156 = vpack.c.b16 %v150, %v149
  %v157 = vpack.c.b16 %v152, %v151
  %v158 = vpack.c.b16 %v154, %v153
  %v167 = vunpack.c.l.b16 %v131
  %v168 = vunpack.c.l.b16 %v132
  %v169 = vunpack.c.l.b16 %v133
  %v170 = vunpack.c.l.b16 %v134
  %v171 = vunpack.c.l.b16 %v135
  %v172 = vunpack.c.l.b16 %v136
  %v173 = vunpack.c.l.b16 %v137
  %v174 = vunpack.c.l.b16 %v138
  %v175 = vpack.c.b16 %v168, %v167
  %v176 = vpack.c.b16 %v170, %v169
  %v177 = vpack.c.b16 %v172, %v171
  %v178 = vpack.c.b16 %v174, %v173
  %vm183 = vcmask 523264
  %v185 = vsel %vm183, %v155, 0
  %v188 = vsel %vm183, %v156, 0
  %v191 = vsel %vm183, %v157, 0
  %v194 = vsel %vm183, %v158, 0
  %196 = vmatpush.bf16.msra.mxu0 0
  %197 = vmatpush.bf16.msra.mxu0 0
  %198 = vmatpush.bf16.msra.mxu0 0
  %199 = vmatpush.bf16.msra.mxu0 0
  %200 = vmatpush.bf16.msra.mxu0 %v178
  %201 = vmatpush.bf16.msra.mxu0 %v177
  %202 = vmatpush.bf16.msra.mxu0 %v176
  %203 = vmatpush.bf16.msra.mxu0 %v175
  %204 = vmatmul.bf16.gmra.mxu0 %v185
  %v205 = vpop.f32.mrf.mxu0
  %v206 = vadd.f32 0.0, %v205
  %v207 = vpop.f32.mrf.mxu0
  %v208 = vadd.f32 0.0, %v207
  %209 = vmatmul.bf16.gmra.mxu0 %v188
  %v210 = vpop.f32.mrf.mxu0
  %v211 = vadd.f32 0.0, %v210
  %v212 = vpop.f32.mrf.mxu0
  %v213 = vadd.f32 0.0, %v212
  %214 = vmatmul.bf16.gmra.mxu0 %v191
  %v215 = vpop.f32.mrf.mxu0
  %v216 = vadd.f32 0.0, %v215
  %v217 = vpop.f32.mrf.mxu0
  %v218 = vadd.f32 0.0, %v217
  %219 = vmatmul.bf16.gmra.mxu0 %v194
  %v220 = vpop.f32.mrf.mxu0
  %v221 = vadd.f32 0.0, %v220
  %v222 = vpop.f32.mrf.mxu0
  %v223 = vadd.f32 0.0, %v222
  %224 = vdwg.mxu0
  %v225 = vadd.f32 %v115, %v206
  %v226 = vadd.f32 %v116, %v208
  %v227 = vadd.f32 %v117, %v211
  %v228 = vadd.f32 %v118, %v213
  %v229 = vadd.f32 %v119, %v216
  %v230 = vadd.f32 %v120, %v218
  %v231 = vadd.f32 %v121, %v221
  %v232 = vadd.f32 %v122, %v223
  %233 = vst [vmem:[#allocation2] sm:$0xff] %v225
  %234 = vst [vmem:[#allocation2 + $0x8] sm:$0xff] %v226
  %235 = vst [vmem:[#allocation2 + $0x10] sm:$0xff] %v227
  %236 = vst [vmem:[#allocation2 + $0x18] sm:$0xff] %v228
  %237 = vst [vmem:[#allocation2 + $0x20] sm:$0xff] %v229
  %238 = vst [vmem:[#allocation2 + $0x28] sm:$0xff] %v230
  %239 = vst [vmem:[#allocation2 + $0x30] sm:$0xff] %v231
  %240 = vst [vmem:[#allocation2 + $0x38] sm:$0xff] %v232
  // Predicated region
  $region26: #{multilayer_gcn_block.2} parent=0 // pred_check
    %p241 = pneg %p21
  $region27: #{multilayer_gcn_block.2} parent=0 // pred_check_branch
    %243 = sbr.rel (%p241) target = $region29
  $region28: #{multilayer_gcn_block.2} parent=0 // pred_region
    %v244 = vld [vmem:[#allocation2] sm:$0xff]
    %v245 = vld [vmem:[#allocation2 + $0x8] sm:$0xff]
    %v246 = vld [vmem:[#allocation2 + $0x10] sm:$0xff]
    %v247 = vld [vmem:[#allocation2 + $0x18] sm:$0xff]
    %v248 = vld [vmem:[#allocation2 + $0x20] sm:$0xff]
    %v249 = vld [vmem:[#allocation2 + $0x28] sm:$0xff]
    %v250 = vld [vmem:[#allocation2 + $0x30] sm:$0xff]
    %v251 = vld [vmem:[#allocation2 + $0x38] sm:$0xff]
    %v252 = vmax.f32 %v244, 0.0
    %v253 = vmax.f32 %v245, 0.0
    %v254 = vmax.f32 %v246, 0.0
    %v255 = vmax.f32 %v247, 0.0
    %v256 = vmax.f32 %v248, 0.0
    %v257 = vmax.f32 %v249, 0.0
    %v258 = vmax.f32 %v250, 0.0
    %v259 = vmax.f32 %v251, 0.0
    %v260 = vpack.c.bf16 %v252, %v252
    %v261 = vpack.c.bf16 %v253, %v253
    %v262 = vpack.c.bf16 %v254, %v254
    %v263 = vpack.c.bf16 %v255, %v255
    %v264 = vpack.c.bf16 %v256, %v256
    %v265 = vpack.c.bf16 %v257, %v257
    %v266 = vpack.c.bf16 %v258, %v258
    %v267 = vpack.c.bf16 %v259, %v259
    %268 = vst [vmem:[%s5] sm:$0xf] %v260
    %269 = vst [vmem:[%s5 + $0x4] sm:$0xf] %v261
    %270 = vst [vmem:[%s5 + $0x8] sm:$0xf] %v262
    %271 = vst [vmem:[%s5 + $0xc] sm:$0xf] %v263
    %272 = vst [vmem:[%s5 + $0x10] sm:$0xf] %v264
    %273 = vst [vmem:[%s5 + $0x14] sm:$0xf] %v265
    %274 = vst [vmem:[%s5 + $0x18] sm:$0xf] %v266
    %275 = vst [vmem:[%s5 + $0x1c] sm:$0xf] %v267
  $region29: #{multilayer_gcn_block.2} parent=0 // pred_fallthru
    _
  // Predicated region
  $region30: #{multilayer_gcn_block.2} parent=0 // pred_check
    _
  $region31: #{multilayer_gcn_block.2} parent=0 // pred_check_branch
    %277 = sbr.rel (0) target = $region33
  $region32: #{multilayer_gcn_block.2} parent=0 // pred_region
    _
  $region33: #{multilayer_gcn_block.2} parent=0 // pred_fallthru
    _
  // Predicated region
  $region34: #{multilayer_gcn_block.2} parent=0 // pred_check
    _
  $region35: #{multilayer_gcn_block.2} parent=0 // pred_check_branch
    %279 = sbr.rel (0) target = $region37
  $region36: #{multilayer_gcn_block.2} parent=0 // pred_region
    _
  $region37: #{multilayer_gcn_block.2} parent=0 // pred_fallthru
    _

// kernel: multilayer_gcn_block.3
$region0: #{multilayer_gcn_block.3}
  #allocation0 [shape = 'u32[]', space=smem, size = 0x4, offset = 0x4, fixed_abs, tag = 'smem constant byte address 0x4 - core index']
  #allocation1 [shape = 'u32[72,128]{1,0:T(1,128)}', space=vmem, size = 0x9000, scoped, tag = 'internal scratch']
  #allocation2 [shape = 'f32[64,128]{1,0:T(8,128)}', space=vmem, size = 0x8000, scoped, tag = 'scratch operand']
  %s0 = inlined_call_operand.vmem [shape: bf16[64,64], index: 0, kind: input, shape index: {}]
  %s1 = inlined_call_operand.vmem [shape: bf16[64,128], index: 1, kind: input, shape index: {}]
  %s2 = inlined_call_operand.vmem [shape: bf16[64,128], index: 2, kind: input, shape index: {}]
  %s3 = inlined_call_operand.vmem [shape: bf16[128,128], index: 3, kind: input, shape index: {}]
  %s4 = inlined_call_operand.vmem [shape: f32[1,128], index: 4, kind: input, shape index: {}]
  %s5 = inlined_call_operand.vmem [shape: f32[64,128], index: 5, kind: output, shape index: {}]
  %s6 = sld [smem:[#allocation0]]
  $region38: #{multilayer_gcn_block.3} parent=0
    _
  %s8 = ssub.s32 1, %s6
  %s9 = scalar_select 0, %s8, %s6
  // Predicated region
  $region2: #{multilayer_gcn_block.3} parent=0 // pred_check
    _
  $region3: #{multilayer_gcn_block.3} parent=0 // pred_check_branch
    %11 = sbr.rel (0) target = $region5
  $region4: #{multilayer_gcn_block.3} parent=0 // pred_region
    _
  $region5: #{multilayer_gcn_block.3} parent=0 // pred_fallthru
    _
  // Predicated region
  $region6: #{multilayer_gcn_block.3} parent=0 // pred_check
    _
  $region7: #{multilayer_gcn_block.3} parent=0 // pred_check_branch
    %13 = sbr.rel (0) target = $region9
  $region8: #{multilayer_gcn_block.3} parent=0 // pred_region
    _
  $region9: #{multilayer_gcn_block.3} parent=0 // pred_fallthru
    _
  // Predicated region
  $region10: #{multilayer_gcn_block.3} parent=0 // pred_check
    _
  $region11: #{multilayer_gcn_block.3} parent=0 // pred_check_branch
    %15 = sbr.rel (0) target = $region13
  $region12: #{multilayer_gcn_block.3} parent=0 // pred_region
    _
  $region13: #{multilayer_gcn_block.3} parent=0 // pred_fallthru
    _
  // Predicated region
  $region14: #{multilayer_gcn_block.3} parent=0 // pred_check
    _
  $region15: #{multilayer_gcn_block.3} parent=0 // pred_check_branch
    %17 = sbr.rel (0) target = $region17
  $region16: #{multilayer_gcn_block.3} parent=0 // pred_region
    _
  $region17: #{multilayer_gcn_block.3} parent=0 // pred_fallthru
    _
  // Predicated region
  $region18: #{multilayer_gcn_block.3} parent=0 // pred_check
    _
  $region19: #{multilayer_gcn_block.3} parent=0 // pred_check_branch
    %19 = sbr.rel (0) target = $region21
  $region20: #{multilayer_gcn_block.3} parent=0 // pred_region
    _
  $region21: #{multilayer_gcn_block.3} parent=0 // pred_fallthru
    _
  %p21 = scmp.eq.s32.totalorder 0, 0
  // Predicated region
  $region22: #{multilayer_gcn_block.3} parent=0 // pred_check
    %p22 = pneg %p21
  $region23: #{multilayer_gcn_block.3} parent=0 // pred_check_branch
    %24 = sbr.rel (%p22) target = $region25
  $region24: #{multilayer_gcn_block.3} parent=0 // pred_region
    %v25 = vld [vmem:[%s2] sm:$0xf]
    %v26 = vld [vmem:[%s2 + $0x4] sm:$0xf]
    %v27 = vld [vmem:[%s2 + $0x8] sm:$0xf]
    %v28 = vld [vmem:[%s2 + $0xc] sm:$0xf]
    %v29 = vld [vmem:[%s2 + $0x10] sm:$0xf]
    %v30 = vld [vmem:[%s2 + $0x14] sm:$0xf]
    %v31 = vld [vmem:[%s2 + $0x18] sm:$0xf]
    %v32 = vld [vmem:[%s2 + $0x1c] sm:$0xf]
    %v33 = vld [vmem:[%s3] sm:$0xf]
    %v34 = vld [vmem:[%s3 + $0x4] sm:$0xf]
    %v35 = vld [vmem:[%s3 + $0x8] sm:$0xf]
    %v36 = vld [vmem:[%s3 + $0xc] sm:$0xf]
    %v37 = vld [vmem:[%s3 + $0x10] sm:$0xf]
    %v38 = vld [vmem:[%s3 + $0x14] sm:$0xf]
    %v39 = vld [vmem:[%s3 + $0x18] sm:$0xf]
    %v40 = vld [vmem:[%s3 + $0x1c] sm:$0xf]
    %v41 = vld [vmem:[%s3 + $0x20] sm:$0xf]
    %v42 = vld [vmem:[%s3 + $0x24] sm:$0xf]
    %v43 = vld [vmem:[%s3 + $0x28] sm:$0xf]
    %v44 = vld [vmem:[%s3 + $0x2c] sm:$0xf]
    %v45 = vld [vmem:[%s3 + $0x30] sm:$0xf]
    %v46 = vld [vmem:[%s3 + $0x34] sm:$0xf]
    %v47 = vld [vmem:[%s3 + $0x38] sm:$0xf]
    %v48 = vld [vmem:[%s3 + $0x3c] sm:$0xf]
    %v49 = vld [vmem:[%s4] sm:$0x1]
    %v51 = vperm.slane %v49, 0
    %v61 = vunpack.c.l.b16 %v25
    %v62 = vunpack.c.l.b16 %v26
    %v63 = vunpack.c.l.b16 %v27
    %v64 = vunpack.c.l.b16 %v28
    %v65 = vunpack.c.l.b16 %v29
    %v66 = vunpack.c.l.b16 %v30
    %v67 = vunpack.c.l.b16 %v31
    %v68 = vunpack.c.l.b16 %v32
    %v69 = vpack.c.b16 %v62, %v61
    %v70 = vpack.c.b16 %v64, %v63
    %v71 = vpack.c.b16 %v66, %v65
    %v72 = vpack.c.b16 %v68, %v67
    %v93 = vunpack.c.l.b16 %v33
    %v94 = vunpack.c.l.b16 %v34
    %v95 = vunpack.c.l.b16 %v35
    %v96 = vunpack.c.l.b16 %v36
    %v97 = vunpack.c.l.b16 %v37
    %v98 = vunpack.c.l.b16 %v38
    %v99 = vunpack.c.l.b16 %v39
    %v100 = vunpack.c.l.b16 %v40
    %v101 = vunpack.c.l.b16 %v41
    %v102 = vunpack.c.l.b16 %v42
    %v103 = vunpack.c.l.b16 %v43
    %v104 = vunpack.c.l.b16 %v44
    %v105 = vunpack.c.l.b16 %v45
    %v106 = vunpack.c.l.b16 %v46
    %v107 = vunpack.c.l.b16 %v47
    %v108 = vunpack.c.l.b16 %v48
    %v109 = vpack.c.b16 %v94, %v93
    %v110 = vpack.c.b16 %v96, %v95
    %v111 = vpack.c.b16 %v98, %v97
    %v112 = vpack.c.b16 %v100, %v99
    %v113 = vpack.c.b16 %v102, %v101
    %v114 = vpack.c.b16 %v104, %v103
    %v115 = vpack.c.b16 %v106, %v105
    %v116 = vpack.c.b16 %v108, %v107
    %125 = vmatpush.bf16.msra.mxu0 %v116
    %126 = vmatpush.bf16.msra.mxu0 %v115
    %127 = vmatpush.bf16.msra.mxu0 %v114
    %128 = vmatpush.bf16.msra.mxu0 %v113
    %129 = vmatpush.bf16.msra.mxu0 %v112
    %130 = vmatpush.bf16.msra.mxu0 %v111
    %131 = vmatpush.bf16.msra.mxu0 %v110
    %132 = vmatpush.bf16.msra.mxu0 %v109
    %133 = vmatmul.bf16.gmra.mxu0 %v69
    %v134 = vpop.f32.mrf.mxu0
    %v135 = vadd.f32 %v51, %v134
    %v136 = vpop.f32.mrf.mxu0
    %v137 = vadd.f32 %v51, %v136
    %138 = vmatmul.bf16.gmra.mxu0 %v70
    %v139 = vpop.f32.mrf.mxu0
    %v140 = vadd.f32 %v51, %v139
    %v141 = vpop.f32.mrf.mxu0
    %v142 = vadd.f32 %v51, %v141
    %143 = vmatmul.bf16.gmra.mxu0 %v71
    %v144 = vpop.f32.mrf.mxu0
    %v145 = vadd.f32 %v51, %v144
    %v146 = vpop.f32.mrf.mxu0
    %v147 = vadd.f32 %v51, %v146
    %148 = vmatmul.bf16.gmra.mxu0 %v72
    %v149 = vpop.f32.mrf.mxu0
    %v150 = vadd.f32 %v51, %v149
    %v151 = vpop.f32.mrf.mxu0
    %v152 = vadd.f32 %v51, %v151
    %153 = vdwg.mxu0
    %154 = vst [vmem:[#allocation2] sm:$0xff] %v135
    %155 = vst [vmem:[#allocation2 + $0x8] sm:$0xff] %v137
    %156 = vst [vmem:[#allocation2 + $0x10] sm:$0xff] %v140
    %157 = vst [vmem:[#allocation2 + $0x18] sm:$0xff] %v142
    %158 = vst [vmem:[#allocation2 + $0x20] sm:$0xff] %v145
    %159 = vst [vmem:[#allocation2 + $0x28] sm:$0xff] %v147
    %160 = vst [vmem:[#allocation2 + $0x30] sm:$0xff] %v150
    %161 = vst [vmem:[#allocation2 + $0x38] sm:$0xff] %v152
  $region25: #{multilayer_gcn_block.3} parent=0 // pred_fallthru
    _
  %v162 = vld [vmem:[#allocation2] sm:$0xff]
  %v163 = vld [vmem:[#allocation2 + $0x8] sm:$0xff]
  %v164 = vld [vmem:[#allocation2 + $0x10] sm:$0xff]
  %v165 = vld [vmem:[#allocation2 + $0x18] sm:$0xff]
  %v166 = vld [vmem:[#allocation2 + $0x20] sm:$0xff]
  %v167 = vld [vmem:[#allocation2 + $0x28] sm:$0xff]
  %v168 = vld [vmem:[#allocation2 + $0x30] sm:$0xff]
  %v169 = vld [vmem:[#allocation2 + $0x38] sm:$0xff]
  %v170 = vld [vmem:[%s0] sm:$0xf]
  %v171 = vld [vmem:[%s0 + $0x4] sm:$0xf]
  %v172 = vld [vmem:[%s0 + $0x8] sm:$0xf]
  %v173 = vld [vmem:[%s0 + $0xc] sm:$0xf]
  %v174 = vld [vmem:[%s0 + $0x10] sm:$0xf]
  %v175 = vld [vmem:[%s0 + $0x14] sm:$0xf]
  %v176 = vld [vmem:[%s0 + $0x18] sm:$0xf]
  %v177 = vld [vmem:[%s0 + $0x1c] sm:$0xf]
  %v178 = vld [vmem:[%s1] sm:$0xf]
  %v179 = vld [vmem:[%s1 + $0x4] sm:$0xf]
  %v180 = vld [vmem:[%s1 + $0x8] sm:$0xf]
  %v181 = vld [vmem:[%s1 + $0xc] sm:$0xf]
  %v182 = vld [vmem:[%s1 + $0x10] sm:$0xf]
  %v183 = vld [vmem:[%s1 + $0x14] sm:$0xf]
  %v184 = vld [vmem:[%s1 + $0x18] sm:$0xf]
  %v185 = vld [vmem:[%s1 + $0x1c] sm:$0xf]
  %v194 = vunpack.c.l.b16 %v170
  %v195 = vunpack.c.l.b16 %v171
  %v196 = vunpack.c.l.b16 %v172
  %v197 = vunpack.c.l.b16 %v173
  %v198 = vunpack.c.l.b16 %v174
  %v199 = vunpack.c.l.b16 %v175
  %v200 = vunpack.c.l.b16 %v176
  %v201 = vunpack.c.l.b16 %v177
  %v202 = vpack.c.b16 %v195, %v194
  %v203 = vpack.c.b16 %v197, %v196
  %v204 = vpack.c.b16 %v199, %v198
  %v205 = vpack.c.b16 %v201, %v200
  %v214 = vunpack.c.l.b16 %v178
  %v215 = vunpack.c.l.b16 %v179
  %v216 = vunpack.c.l.b16 %v180
  %v217 = vunpack.c.l.b16 %v181
  %v218 = vunpack.c.l.b16 %v182
  %v219 = vunpack.c.l.b16 %v183
  %v220 = vunpack.c.l.b16 %v184
  %v221 = vunpack.c.l.b16 %v185
  %v222 = vpack.c.b16 %v215, %v214
  %v223 = vpack.c.b16 %v217, %v216
  %v224 = vpack.c.b16 %v219, %v218
  %v225 = vpack.c.b16 %v221, %v220
  %vm230 = vcmask 523264
  %v232 = vsel %vm230, %v202, 0
  %v235 = vsel %vm230, %v203, 0
  %v238 = vsel %vm230, %v204, 0
  %v241 = vsel %vm230, %v205, 0
  %243 = vmatpush.bf16.msra.mxu0 0
  %244 = vmatpush.bf16.msra.mxu0 0
  %245 = vmatpush.bf16.msra.mxu0 0
  %246 = vmatpush.bf16.msra.mxu0 0
  %247 = vmatpush.bf16.msra.mxu0 %v225
  %248 = vmatpush.bf16.msra.mxu0 %v224
  %249 = vmatpush.bf16.msra.mxu0 %v223
  %250 = vmatpush.bf16.msra.mxu0 %v222
  %251 = vmatmul.bf16.gmra.mxu0 %v232
  %v252 = vpop.f32.mrf.mxu0
  %v253 = vadd.f32 0.0, %v252
  %v254 = vpop.f32.mrf.mxu0
  %v255 = vadd.f32 0.0, %v254
  %256 = vmatmul.bf16.gmra.mxu0 %v235
  %v257 = vpop.f32.mrf.mxu0
  %v258 = vadd.f32 0.0, %v257
  %v259 = vpop.f32.mrf.mxu0
  %v260 = vadd.f32 0.0, %v259
  %261 = vmatmul.bf16.gmra.mxu0 %v238
  %v262 = vpop.f32.mrf.mxu0
  %v263 = vadd.f32 0.0, %v262
  %v264 = vpop.f32.mrf.mxu0
  %v265 = vadd.f32 0.0, %v264
  %266 = vmatmul.bf16.gmra.mxu0 %v241
  %v267 = vpop.f32.mrf.mxu0
  %v268 = vadd.f32 0.0, %v267
  %v269 = vpop.f32.mrf.mxu0
  %v270 = vadd.f32 0.0, %v269
  %271 = vdwg.mxu0
  %v272 = vadd.f32 %v162, %v253
  %v273 = vadd.f32 %v163, %v255
  %v274 = vadd.f32 %v164, %v258
  %v275 = vadd.f32 %v165, %v260
  %v276 = vadd.f32 %v166, %v263
  %v277 = vadd.f32 %v167, %v265
  %v278 = vadd.f32 %v168, %v268
  %v279 = vadd.f32 %v169, %v270
  %280 = vst [vmem:[#allocation2] sm:$0xff] %v272
  %281 = vst [vmem:[#allocation2 + $0x8] sm:$0xff] %v273
  %282 = vst [vmem:[#allocation2 + $0x10] sm:$0xff] %v274
  %283 = vst [vmem:[#allocation2 + $0x18] sm:$0xff] %v275
  %284 = vst [vmem:[#allocation2 + $0x20] sm:$0xff] %v276
  %285 = vst [vmem:[#allocation2 + $0x28] sm:$0xff] %v277
  %286 = vst [vmem:[#allocation2 + $0x30] sm:$0xff] %v278
  %287 = vst [vmem:[#allocation2 + $0x38] sm:$0xff] %v279
  // Predicated region
  $region26: #{multilayer_gcn_block.3} parent=0 // pred_check
    %p288 = pneg %p21
  $region27: #{multilayer_gcn_block.3} parent=0 // pred_check_branch
    %290 = sbr.rel (%p288) target = $region29
  $region28: #{multilayer_gcn_block.3} parent=0 // pred_region
    %v291 = vld [vmem:[#allocation2] sm:$0xff]
    %v292 = vld [vmem:[#allocation2 + $0x8] sm:$0xff]
    %v293 = vld [vmem:[#allocation2 + $0x10] sm:$0xff]
    %v294 = vld [vmem:[#allocation2 + $0x18] sm:$0xff]
    %v295 = vld [vmem:[#allocation2 + $0x20] sm:$0xff]
    %v296 = vld [vmem:[#allocation2 + $0x28] sm:$0xff]
    %v297 = vld [vmem:[#allocation2 + $0x30] sm:$0xff]
    %v298 = vld [vmem:[#allocation2 + $0x38] sm:$0xff]
    %v299 = vmax.f32 %v291, 0.0
    %v300 = vmax.f32 %v292, 0.0
    %v301 = vmax.f32 %v293, 0.0
    %v302 = vmax.f32 %v294, 0.0
    %v303 = vmax.f32 %v295, 0.0
    %v304 = vmax.f32 %v296, 0.0
    %v305 = vmax.f32 %v297, 0.0
    %v306 = vmax.f32 %v298, 0.0
    %307 = vst [vmem:[%s5] sm:$0xff] %v299
    %308 = vst [vmem:[%s5 + $0x8] sm:$0xff] %v300
    %309 = vst [vmem:[%s5 + $0x10] sm:$0xff] %v301
    %310 = vst [vmem:[%s5 + $0x18] sm:$0xff] %v302
    %311 = vst [vmem:[%s5 + $0x20] sm:$0xff] %v303
    %312 = vst [vmem:[%s5 + $0x28] sm:$0xff] %v304
    %313 = vst [vmem:[%s5 + $0x30] sm:$0xff] %v305
    %314 = vst [vmem:[%s5 + $0x38] sm:$0xff] %v306
  $region29: #{multilayer_gcn_block.3} parent=0 // pred_fallthru
    _
  // Predicated region
  $region30: #{multilayer_gcn_block.3} parent=0 // pred_check
    _
  $region31: #{multilayer_gcn_block.3} parent=0 // pred_check_branch
    %316 = sbr.rel (0) target = $region33
  $region32: #{multilayer_gcn_block.3} parent=0 // pred_region
    _
  $region33: #{multilayer_gcn_block.3} parent=0 // pred_fallthru
    _
  // Predicated region
  $region34: #{multilayer_gcn_block.3} parent=0 // pred_check
    _
  $region35: #{multilayer_gcn_block.3} parent=0 // pred_check_branch
    %318 = sbr.rel (0) target = $region37
  $region36: #{multilayer_gcn_block.3} parent=0 // pred_region
    _
  $region37: #{multilayer_gcn_block.3} parent=0 // pred_fallthru
    _

</llo_original>
